<compile_context>
chip_gen: v7x
topology: tpu7x:2x2x1
jax: 0.10.0
libtpu: 0.0.40
codegen_flags: <defaults>
</compile_context>

<pallas_src>
from typing import NamedTuple, Optional

import jax
import jax.numpy as jnp
from jax.experimental import pallas as pl
from jax.experimental.pallas import tpu as pltpu


# ----------------------------- small helpers -------------------------------

def _cdiv(a, b):
    return -(-a // b)


def _round_up(n, m):
    return ((n + m - 1) // m) * m


def _pick_tile(padded, desired):
    """Largest multiple of 128 that divides `padded` and is <= `desired`."""
    m = padded // 128
    best = 1
    for d in range(1, max(1, desired // 128) + 1):
        if d <= m and m % d == 0:
            best = d
    return best * 128


def _spec(shape, index_map, *, buffers=None):
    """BlockSpec with optional explicit buffer count (Buffered(1) for
    grid-invariant operands). Falls back cleanly on JAX versions without
    the pipeline_mode kwarg."""
    if buffers is not None:
        try:
            return pl.BlockSpec(shape, index_map,
                                pipeline_mode=pl.Buffered(buffers))
        except TypeError:
            pass
    return pl.BlockSpec(shape, index_map)


def _vmem_capacity_bytes():
    try:
        return int(pltpu.get_tpu_info().vmem_capacity_bytes)
    except Exception:
        return 64 << 20      # conservative default (v7x per-TC VMEM)


def _num_tensorcores_per_chip():
    try:
        kind = jax.devices()[0].device_kind.lower()
    except Exception:
        return 1
    return 2 if "v7" in kind else 1


# -------------------------------- kernels ----------------------------------

def _rwf_resident_kernel(x_ref, vt_ref, scale_ref, bias_ref, o_ref):
    # x_ref    : (TB, IN_p)     input batch tile (f32 or compute dtype)
    # vt_ref   : (IN_p, OUT_p)  V^T, grid-resident, single-buffered
    # scale_ref: (1, OUT_p)     exp(s), f32
    # bias_ref : (1, OUT_p)     bias,   f32
    a = x_ref[...]
    if a.dtype != vt_ref.dtype:
        a = a.astype(vt_ref.dtype)          # cast hides under the MXU
    acc = jnp.dot(a, vt_ref[...], preferred_element_type=jnp.float32)
    o_ref[...] = (acc * scale_ref[...] + bias_ref[...]).astype(o_ref.dtype)


def _rwf_tiled_kernel(x_ref, vt_ref, scale_ref, bias_ref, o_ref, acc_ref):
    # Grid: (i over batch, j over OUT, k over IN) with k = reduction axis.
    k = pl.program_id(2)

    @pl.when(k == 0)
    def _():
        acc_ref[...] = jnp.zeros_like(acc_ref)

    a = x_ref[...]
    if a.dtype != vt_ref.dtype:
        a = a.astype(vt_ref.dtype)
    acc_ref[...] += jnp.dot(a, vt_ref[...], preferred_element_type=jnp.float32)

    @pl.when(k == pl.num_programs(2) - 1)
    def _():
        o_ref[...] = (acc_ref[...] * scale_ref[...]
                      + bias_ref[...]).astype(o_ref.dtype)


# ---------------------------- parameter prepare -----------------------------

class RWFParams(NamedTuple):
    vt: jax.Array          # (IN_p, OUT_p) compute dtype, V^T zero-padded
    scale: jax.Array       # (1, OUT_p)    f32, exp(s) zero-padded
    bias: jax.Array        # (1, OUT_p)    f32, zero-padded
    in_features: int
    out_features: int


def prepare_rwf_params(V, s, bias, *, compute_dtype=jnp.bfloat16):
    """One-time weight transform (hoisted out of the per-call path):
    pad + transpose + cast V, fold exp(s) into a precomputed scale vector."""
    OUT, IN = V.shape
    cdt = jnp.dtype(compute_dtype)
    IN_p = _round_up(IN, 128)
    OUT_p = _round_up(OUT, 128)
    vt = jnp.zeros((IN_p, OUT_p), cdt).at[:IN, :OUT].set(V.T.astype(cdt))
    scale = jnp.zeros((1, OUT_p), jnp.float32).at[0, :OUT].set(
        jnp.exp(s.astype(jnp.float32)))
    b = jnp.zeros((1, OUT_p), jnp.float32).at[0, :OUT].set(
        bias.astype(jnp.float32))
    return RWFParams(vt, scale, b, IN, OUT)


# --------------------------------- forward ----------------------------------

def rwf_forward(x, params: RWFParams, *, tile_b=256, tile_n=1024, tile_k=512,
                out_dtype: Optional[jnp.dtype] = None,
                force_tiled=False, x_buffers=None):
    """y = x @ (diag(exp(s)) @ V).T + bias as a Pallas TPU kernel."""
    B, IN = x.shape
    assert IN == params.in_features, "x feature dim mismatch"
    vt, scale, bias = params.vt, params.scale, params.bias
    IN_p, OUT_p = vt.shape
    OUT = params.out_features

    cdt = jnp.dtype(vt.dtype)
    out_dtype = jnp.dtype(out_dtype) if out_dtype is not None else x.dtype
    cbytes = cdt.itemsize
    obytes = out_dtype.itemsize

    # --- batch tiling: split B evenly (bounded padding), only force a
    #     >=2-step grid on chips with 2 TensorCores (v7x megacore). ---
    nsteps = max(1, _cdiv(B, tile_b))
    if nsteps < 2 and B > 128 and _num_tensorcores_per_chip() >= 2:
        nsteps = 2
    align = 16 if cbytes == 2 else 8        # bf16 sublane-dense x tiles
    tb = _round_up(_cdiv(B, nsteps), align)
    B_p = _round_up(B, tb)

    # --- x: skip the wrapper pad/copy pass when already tile-aligned;
    #     the in-kernel cast to the compute dtype is free under the MXU. ---
    if (B_p == B) and (IN_p == IN):
        x_in = x
    else:
        x_in = jnp.zeros((B_p, IN_p), cdt).at[:B, :IN].set(x.astype(cdt))
    xbytes = jnp.dtype(x_in.dtype).itemsize

    # --- per-generation VMEM budget (128 MiB on v5e/v6e, 64 MiB on v7x)
    #     with headroom for Mosaic internal scratch. ---
    vmem_cap = max(_vmem_capacity_bytes() - (8 << 20), 16 << 20)

    # Resident footprint with V^T / scale / bias single-buffered.
    resident_bytes = (IN_p * OUT_p * cbytes          # V^T  (Buffered(1))
                      + 2 * OUT_p * 4                # scale + bias
                      + 2 * tb * IN_p * xbytes       # x tiles (double-buffered)
                      + 2 * tb * OUT_p * obytes)     # out tiles
    use_resident = (not force_tiled) and (
        int(resident_bytes * 1.25) + (2 << 20) <= vmem_cap)

    if use_resident:
        vmem_limit = max(min(int(resident_bytes * 1.25) + (2 << 20), vmem_cap),
                         16 << 20)
        cost = pl.CostEstimate(
            flops=2 * B_p * IN_p * OUT_p,
            transcendentals=0,
            bytes_accessed=(B_p * IN_p * xbytes + IN_p * OUT_p * cbytes
                            + 2 * OUT_p * 4 + B_p * OUT_p * obytes))
        y_p = pl.pallas_call(
            _rwf_resident_kernel,
            out_shape=jax.ShapeDtypeStruct((B_p, OUT_p), out_dtype),
            grid_spec=pltpu.PrefetchScalarGridSpec(
                num_scalar_prefetch=0,
                grid=(B_p // tb,),
                in_specs=[
                    _spec((tb, IN_p), lambda i: (i, 0), buffers=x_buffers),
                    _spec((IN_p, OUT_p), lambda i: (0, 0), buffers=1),
                    _spec((1, OUT_p), lambda i: (0, 0), buffers=1),
                    _spec((1, OUT_p), lambda i: (0, 0), buffers=1),
                ],
                out_specs=pl.BlockSpec((tb, OUT_p), lambda i: (i, 0)),
            ),
            compiler_params=pltpu.CompilerParams(
                dimension_semantics=("parallel",),
                vmem_limit_bytes=int(vmem_limit),
            ),
            cost_estimate=cost,
        )(x_in, vt, scale, bias)
    else:
        # OUT/K-tiled path with f32 VMEM accumulator (pl.when init / store).
        tn = _pick_tile(OUT_p, tile_n)
        tk = _pick_tile(IN_p, tile_k)
        grid = (B_p // tb, OUT_p // tn, IN_p // tk)
        tiled_bytes = (2 * tb * tk * xbytes        # x tiles
                       + 2 * tk * tn * cbytes      # V^T tiles
                       + 2 * 2 * tn * 4            # scale + bias tiles
                       + 2 * tb * tn * obytes      # out tiles
                       + tb * tn * 4)              # f32 accumulator
        vmem_limit = max(min(int(tiled_bytes * 1.25) + (2 << 20), vmem_cap),
                         16 << 20)
        cost = pl.CostEstimate(
            flops=2 * B_p * IN_p * OUT_p,
            transcendentals=0,
            bytes_accessed=((B_p // tb) * IN_p * OUT_p * cbytes
                            + (OUT_p // tn) * B_p * IN_p * xbytes
                            + 2 * OUT_p * 4 + B_p * OUT_p * obytes))
        y_p = pl.pallas_call(
            _rwf_tiled_kernel,
            out_shape=jax.ShapeDtypeStruct((B_p, OUT_p), out_dtype),
            grid_spec=pltpu.PrefetchScalarGridSpec(
                num_scalar_prefetch=0,
                grid=grid,
                in_specs=[
                    pl.BlockSpec((tb, tk), lambda i, j, k: (i, k)),
                    pl.BlockSpec((tk, tn), lambda i, j, k: (k, j)),
                    pl.BlockSpec((1, tn), lambda i, j, k: (0, j)),
                    pl.BlockSpec((1, tn), lambda i, j, k: (0, j)),
                ],
                out_specs=pl.BlockSpec((tb, tn), lambda i, j, k: (i, j)),
                scratch_shapes=[pltpu.VMEM((tb, tn), jnp.float32)],
            ),
            compiler_params=pltpu.CompilerParams(
                dimension_semantics=("parallel", "parallel", "arbitrary"),
                vmem_limit_bytes=int(vmem_limit),
            ),
            cost_estimate=cost,
        )(x_in, vt, scale, bias)

    if (B_p != B) or (OUT_p != OUT):
        y_p = y_p[:B, :OUT]
    return y_p


def rwf_reference(x, V, s, bias):
    w = jnp.exp(s)[:, None] * V             # diag(exp(s)) @ V
    return x @ w.T + bias[None, :]


# ---------------------------------- demo ------------------------------------

if __name__ == "__main__":
    key = jax.random.PRNGKey(0)
    k_v, k_s, k_x, k_v2, k_s2, k_x2 = jax.random.split(key, 6)
    mu, sigma = 0.5, 0.1

    # --- Test 1: small shapes, resident-V^T path, bf16 compute. ---
    batch, in_f, out_f = 8, 32, 64
    xavier_std = (2.0 / (in_f + out_f)) ** 0.5
    V = jax.random.normal(k_v, (out_f, in_f), jnp.float32) * xavier_std
    s = jax.random.normal(k_s, (out_f,), jnp.float32) * sigma + mu
    bias = jnp.zeros((out_f,), jnp.float32)
    x = jax.random.normal(k_x, (batch, in_f), jnp.float32)

    params = prepare_rwf_params(V, s, bias)            # one-time transform
    y = jax.block_until_ready(rwf_forward(x, params))
    y_ref = rwf_reference(x, V, s, bias)
    assert y.shape == (batch, out_f)
    # bf16 MXU inputs, f32 accumulation: loosened tolerance vs f32 reference.
    assert jnp.allclose(y, y_ref, atol=2e-2, rtol=2e-2), "resident path mismatch"

    # --- Test 2: force the OUT/K-tiled accumulator path, f32 compute. ---
    batch2, in_f2, out_f2 = 32, 256, 256
    xavier_std2 = (2.0 / (in_f2 + out_f2)) ** 0.5
    V2 = jax.random.normal(k_v2, (out_f2, in_f2), jnp.float32) * xavier_std2
    s2 = jax.random.normal(k_s2, (out_f2,), jnp.float32) * sigma + mu
    b2 = jnp.zeros((out_f2,), jnp.float32)
    x2 = jax.random.normal(k_x2, (batch2, in_f2), jnp.float32)

    params2 = prepare_rwf_params(V2, s2, b2, compute_dtype=jnp.float32)
    y2 = jax.block_until_ready(
        rwf_forward(x2, params2, tile_n=128, tile_k=128, force_tiled=True))
    y2_ref = rwf_reference(x2, V2, s2, b2)
    assert y2.shape == (batch2, out_f2)
    assert jnp.allclose(y2, y2_ref, atol=2e-2, rtol=2e-2), "tiled path mismatch"

    print("KERNEL_OK")
</pallas_src>

<mosaic_0001>
module attributes {stable_mosaic.version = 11 : i64} {
  func.func @_rwf_resident_kernel(%arg0: i32, %arg1: memref<16x128xbf16, #tpu.memory_space<vmem>>, %arg2: memref<128x128xbf16, #tpu.memory_space<vmem>>, %arg3: memref<1x128xf32, #tpu.memory_space<vmem>>, %arg4: memref<1x128xf32, #tpu.memory_space<vmem>>, %arg5: memref<16x128xf32, #tpu.memory_space<vmem>>) attributes {dimension_semantics = [#tpu.dimension_semantics<parallel>], iteration_bounds = array<i64: 1>, scalar_prefetch = 0 : i64, scratch_operands = 0 : i64, tpu.core_type = #tpu.core_type<tc>, window_params = [{transform_indices = @transform_0, window_bounds = array<i64: 16, 128>}, {pipeline_mode = #tpu.pipeline_mode<synchronous>, transform_indices = @transform_1, window_bounds = array<i64: 128, 128>}, {pipeline_mode = #tpu.pipeline_mode<synchronous>, transform_indices = @transform_2, window_bounds = array<i64: 1, 128>}, {pipeline_mode = #tpu.pipeline_mode<synchronous>, transform_indices = @transform_3, window_bounds = array<i64: 1, 128>}, {transform_indices = @transform_4, window_bounds = array<i64: 16, 128>}]} {
    %c0 = arith.constant 0 : index
    %c0_0 = arith.constant 0 : index
    %0 = vector.load %arg1[%c0, %c0_0] : memref<16x128xbf16, #tpu.memory_space<vmem>>, vector<16x128xbf16>
    %c0_1 = arith.constant 0 : index
    %c0_2 = arith.constant 0 : index
    %1 = vector.load %arg2[%c0_1, %c0_2] : memref<128x128xbf16, #tpu.memory_space<vmem>>, vector<128x128xbf16>
    %cst = arith.constant dense<0.000000e+00> : vector<16x128xf32>
    %2 = tpu.matmul %0, %1, %cst {dimension_numbers = #tpu.dot_dimension_numbers<[1], [0], [0], [1], [0, 0, 1, 1], [], []>} : vector<16x128xbf16>, vector<128x128xbf16>, vector<16x128xf32> -> vector<16x128xf32>
    %c0_3 = arith.constant 0 : index
    %c0_4 = arith.constant 0 : index
    %3 = vector.load %arg3[%c0_3, %c0_4] : memref<1x128xf32, #tpu.memory_space<vmem>>, vector<1x128xf32>
    %4 = vector.broadcast %3 : vector<1x128xf32> to vector<16x128xf32>
    %5 = arith.mulf %2, %4 : vector<16x128xf32>
    %c0_5 = arith.constant 0 : index
    %c0_6 = arith.constant 0 : index
    %6 = vector.load %arg4[%c0_5, %c0_6] : memref<1x128xf32, #tpu.memory_space<vmem>>, vector<1x128xf32>
    %7 = vector.broadcast %6 : vector<1x128xf32> to vector<16x128xf32>
    %8 = arith.addf %5, %7 : vector<16x128xf32>
    %c0_7 = arith.constant 0 : index
    %c0_8 = arith.constant 0 : index
    %9 = vector.load %arg5[%c0_7, %c0_8] : memref<16x128xf32, #tpu.memory_space<vmem>>, vector<16x128xf32>
    tpu.vector_store %arg5[%c0_7, %c0_8], %8 {strides = array<i32>} : memref<16x128xf32, #tpu.memory_space<vmem>>, vector<16x128xf32>,
    return
  }
  func.func @transform_0(%arg0: i32) -> (i32, i32) {
    %c0_i32 = arith.constant 0 : i32
    %c0_i32_0 = arith.constant 0 : i32
    return %arg0, %c0_i32 : i32, i32
  }
  func.func @transform_1(%arg0: i32) -> (i32, i32) {
    %c0_i32 = arith.constant 0 : i32
    %c0_i32_0 = arith.constant 0 : i32
    %c0_i32_1 = arith.constant 0 : i32
    return %c0_i32, %c0_i32_0 : i32, i32
  }
  func.func @transform_2(%arg0: i32) -> (i32, i32) {
    %c0_i32 = arith.constant 0 : i32
    %c0_i32_0 = arith.constant 0 : i32
    %c0_i32_1 = arith.constant 0 : i32
    return %c0_i32, %c0_i32_0 : i32, i32
  }
  func.func @transform_3(%arg0: i32) -> (i32, i32) {
    %c0_i32 = arith.constant 0 : i32
    %c0_i32_0 = arith.constant 0 : i32
    %c0_i32_1 = arith.constant 0 : i32
    return %c0_i32, %c0_i32_0 : i32, i32
  }
  func.func @transform_4(%arg0: i32) -> (i32, i32) {
    %c0_i32 = arith.constant 0 : i32
    %c0_i32_0 = arith.constant 0 : i32
    return %arg0, %c0_i32 : i32, i32
  }
}

</mosaic_0001>

<llo_original>
// kernel: tpu_custom_call.1
$region0: #{tpu_custom_call.1}
  #allocation0 [shape = 'u32[]', space=smem, size = 0x4, offset = 0x4, fixed_abs, tag = 'smem constant byte address 0x4 - core index']
  #allocation1 [shape = 'u32[144,128]{1,0:T(1,128)}', space=vmem, size = 0x12000, scoped, tag = 'internal scratch']
  %s0 = inlined_call_operand.hbm [shape: bf16[16,128], index: 0, kind: input, shape index: {}]
  %s1 = inlined_call_operand.hbm [shape: bf16[128,128], index: 1, kind: input, shape index: {}]
  %s2 = inlined_call_operand.vmem [shape: f32[1,128], index: 2, kind: input, shape index: {}]
  %s3 = inlined_call_operand.vmem [shape: f32[1,128], index: 3, kind: input, shape index: {}]
  %s4 = inlined_call_operand.hbm [shape: f32[16,128], index: 4, kind: output, shape index: {}]
  %s5 = sld [smem:[#allocation0]]
  $region34: #{tpu_custom_call.1} parent=0
    _
  %s7 = ssub.s32 1, %s5
  %s8 = scalar_select 0, %s7, %s5
  $region1: #{tpu_custom_call.1} parent=0
    #allocation2 [shape = 'u8[4096]{0}', space=vmem, size = 0x1000, scoped, tag = 'input window, operand 0, single buffered']
    #allocation3 [shape = 's32[1]{0}', space=sflag, size = 0x4, scoped, tag = 'scoped memory for tpu_custom_call.1']
    #allocation4 [shape = 's32[1]{0}', space=sflag, size = 0x4, scoped, tag = 'scoped memory for tpu_custom_call.1']
    #allocation5 [shape = 'u8[32768]{0}', space=vmem, size = 0x8000, scoped, tag = 'input window, operand 1, single buffered']
    #allocation6 [shape = 's32[1]{0}', space=sflag, size = 0x4, scoped, tag = 'scoped memory for tpu_custom_call.1']
    #allocation7 [shape = 'u8[8192]{0}', space=vmem, size = 0x2000, scoped, tag = 'output window, operand 0, single buffered']
    %9 = vsyncpa [#allocation3], 0
    %10 = vsyncpa [#allocation6], 0
    %11 = vsyncpa [#allocation4], 0
    // Predicated region
    $region2: #{tpu_custom_call.1} parent=1 // pred_check
      _
    $region3: #{tpu_custom_call.1} parent=1 // pred_check_branch
      %13 = sbr.rel (0) target = $region5
    $region4: #{tpu_custom_call.1} parent=1 // pred_region
      %s15 = ssub.s32 128, 128
      %16 = vsyncadd [#allocation3], %s15
      %s17 = sshll.u32 [#allocation2], 4
      %s18 = int_to_ptr.vmem [resolvable:$true] %s17
      %23 = dma.hbm_to_vmem [thread:$0]  %s0, 128, %s18, [#allocation3], 64, 64, 4
    $region5: #{tpu_custom_call.1} parent=1 // pred_fallthru
      _
    // Predicated region
    $region6: #{tpu_custom_call.1} parent=1 // pred_check
      _
    $region7: #{tpu_custom_call.1} parent=1 // pred_check_branch
      %25 = sbr.rel (0) target = $region9
    $region8: #{tpu_custom_call.1} parent=1 // pred_region
      %s27 = ssub.s32 1024, 1024
      %28 = vsyncadd [#allocation6], %s27
      %s29 = sshll.u32 [#allocation5], 4
      %s30 = int_to_ptr.vmem [resolvable:$true] %s29
      %35 = dma.hbm_to_vmem [thread:$0]  %s1, 1024, %s30, [#allocation6], 64, 64, 4
    $region9: #{tpu_custom_call.1} parent=1 // pred_fallthru
      _
    // Predicated region
    $region10: #{tpu_custom_call.1} parent=1 // pred_check
      _
    $region11: #{tpu_custom_call.1} parent=1 // pred_check_branch
      %37 = sbr.rel (0) target = $region13
    $region12: #{tpu_custom_call.1} parent=1 // pred_region
      _
    $region13: #{tpu_custom_call.1} parent=1 // pred_fallthru
      _
    // Predicated region
    $region14: #{tpu_custom_call.1} parent=1 // pred_check
      _
    $region15: #{tpu_custom_call.1} parent=1 // pred_check_branch
      %39 = sbr.rel (0) target = $region17
    $region16: #{tpu_custom_call.1} parent=1 // pred_region
      _
    $region17: #{tpu_custom_call.1} parent=1 // pred_fallthru
      _
    // Predicated region
    $region18: #{tpu_custom_call.1} parent=1 // pred_check
      _
    $region19: #{tpu_custom_call.1} parent=1 // pred_check_branch
      %41 = sbr.rel (0) target = $region21
    $region20: #{tpu_custom_call.1} parent=1 // pred_region
      %42 = dma.done [#allocation3], 128
    $region21: #{tpu_custom_call.1} parent=1 // pred_fallthru
      _
    // Predicated region
    $region22: #{tpu_custom_call.1} parent=1 // pred_check
      _
    $region23: #{tpu_custom_call.1} parent=1 // pred_check_branch
      %44 = sbr.rel (0) target = $region25
    $region24: #{tpu_custom_call.1} parent=1 // pred_region
      %45 = dma.done [#allocation6], 1024
    $region25: #{tpu_custom_call.1} parent=1 // pred_fallthru
      _
    %v47 = vld [vmem:[#allocation2] sm:$0xf]
    %v48 = vld [vmem:[#allocation2 + $0x4] sm:$0xf]
    %v49 = vld [vmem:[#allocation5] sm:$0xf]
    %v50 = vld [vmem:[#allocation5 + $0x4] sm:$0xf]
    %v51 = vld [vmem:[#allocation5 + $0x8] sm:$0xf]
    %v52 = vld [vmem:[#allocation5 + $0xc] sm:$0xf]
    %v53 = vld [vmem:[#allocation5 + $0x10] sm:$0xf]
    %v54 = vld [vmem:[#allocation5 + $0x14] sm:$0xf]
    %v55 = vld [vmem:[#allocation5 + $0x18] sm:$0xf]
    %v56 = vld [vmem:[#allocation5 + $0x1c] sm:$0xf]
    %v57 = vld [vmem:[#allocation5 + $0x20] sm:$0xf]
    %v58 = vld [vmem:[#allocation5 + $0x24] sm:$0xf]
    %v59 = vld [vmem:[#allocation5 + $0x28] sm:$0xf]
    %v60 = vld [vmem:[#allocation5 + $0x2c] sm:$0xf]
    %v61 = vld [vmem:[#allocation5 + $0x30] sm:$0xf]
    %v62 = vld [vmem:[#allocation5 + $0x34] sm:$0xf]
    %v63 = vld [vmem:[#allocation5 + $0x38] sm:$0xf]
    %v64 = vld [vmem:[#allocation5 + $0x3c] sm:$0xf]
    %v67 = vunpack.c.l.b16 %v47
    %v68 = vunpack.c.l.b16 %v48
    %v69 = vpack.c.b16 %v68, %v67
    %v87 = vunpack.c.l.b16 %v49
    %v88 = vunpack.c.l.b16 %v50
    %v89 = vunpack.c.l.b16 %v51
    %v90 = vunpack.c.l.b16 %v52
    %v91 = vunpack.c.l.b16 %v53
    %v92 = vunpack.c.l.b16 %v54
    %v93 = vunpack.c.l.b16 %v55
    %v94 = vunpack.c.l.b16 %v56
    %v95 = vunpack.c.l.b16 %v57
    %v96 = vunpack.c.l.b16 %v58
    %v97 = vunpack.c.l.b16 %v59
    %v98 = vunpack.c.l.b16 %v60
    %v99 = vunpack.c.l.b16 %v61
    %v100 = vunpack.c.l.b16 %v62
    %v101 = vunpack.c.l.b16 %v63
    %v102 = vunpack.c.l.b16 %v64
    %v103 = vpack.c.b16 %v88, %v87
    %v104 = vpack.c.b16 %v90, %v89
    %v105 = vpack.c.b16 %v92, %v91
    %v106 = vpack.c.b16 %v94, %v93
    %v107 = vpack.c.b16 %v96, %v95
    %v108 = vpack.c.b16 %v98, %v97
    %v109 = vpack.c.b16 %v100, %v99
    %v110 = vpack.c.b16 %v102, %v101
    %119 = vmatprep.subr.bf16.mxu0 0
    %120 = vmatpush1.bf16.msra.mxu0 %v103
    %121 = vmatprep.subr.bf16.mxu0 0
    %122 = vmatpush1.bf16.msra.mxu0 %v104
    %123 = vmatprep.subr.bf16.mxu0 0
    %124 = vmatpush1.bf16.msra.mxu0 %v105
    %125 = vmatprep.subr.bf16.mxu0 0
    %126 = vmatpush1.bf16.msra.mxu0 %v106
    %127 = vmatprep.subr.bf16.mxu0 0
    %128 = vmatpush1.bf16.msra.mxu0 %v107
    %129 = vmatprep.subr.bf16.mxu0 0
    %130 = vmatpush1.bf16.msra.mxu0 %v108
    %131 = vmatprep.subr.bf16.mxu0 0
    %132 = vmatpush1.bf16.msra.mxu0 %v109
    %133 = vmatprep.subr.bf16.mxu0 0
    %134 = vmatpush1.bf16.msra.mxu0 %v110
    %135 = vmatprep.subr.bf16.mxu0 0
    %136 = vmatpush1.bf16.msra.mxu0 0
    %137 = vmatprep.subr.bf16.mxu0 0
    %138 = vmatpush1.bf16.msra.mxu0 0
    %139 = vmatprep.subr.bf16.mxu0 0
    %140 = vmatpush1.bf16.msra.mxu0 0
    %141 = vmatprep.subr.bf16.mxu0 0
    %142 = vmatpush1.bf16.msra.mxu0 0
    %143 = vmatprep.subr.bf16.mxu0 0
    %144 = vmatpush1.bf16.msra.mxu0 0
    %145 = vmatprep.subr.bf16.mxu0 0
    %146 = vmatpush1.bf16.msra.mxu0 0
    %147 = vmatprep.subr.bf16.mxu0 0
    %148 = vmatpush1.bf16.msra.mxu0 0
    %149 = vmatprep.subr.bf16.mxu0 0
    %150 = vmatpush1.bf16.msra.mxu0 0
    %151 = vmatprep.mubr.bf16.mxu0 0
    %152 = vmatmul.mubr.bf16.gmra.mrb[0].mxu0 %v69
    %v153 = vpop.f32.mrb[0].mxu0
    %v154 = vadd.f32 0.0, %v153
    %v155 = vpop.f32.mrb[0].mxu0
    %v156 = vpop.f32.mrb[0].mxu0
    %v157 = vadd.f32 0.0, %v156
    %v158 = vpop.f32.mrb[0].mxu0
    %159 = vdwg.mxu0
    %v160 = vld [vmem:[%s2] sm:$0x1]
    %v162 = vlaneseq
    %v163 = vshrl.u32 %v162, 7
    %v164 = vsub.s32 0, %v163
    %v165 = vrot.slane %v160, %v164
    %v167 = vmul.f32 %v154, %v165
    %v168 = vmul.f32 %v157, %v165
    %v169 = vld [vmem:[%s3] sm:$0x1]
    %v171 = vlaneseq
    %v172 = vshrl.u32 %v171, 7
    %v173 = vsub.s32 0, %v172
    %v174 = vrot.slane %v169, %v173
    %v176 = vadd.f32 %v167, %v174
    %v177 = vadd.f32 %v168, %v174
    %178 = vst [vmem:[#allocation7] sm:$0xff] %v176
    %179 = vst [vmem:[#allocation7 + $0x8] sm:$0xff] %v177
    // Predicated region
    $region26: #{tpu_custom_call.1} parent=1 // pred_check
      _
    $region27: #{tpu_custom_call.1} parent=1 // pred_check_branch
      %181 = sbr.rel (0) target = $region29
    $region28: #{tpu_custom_call.1} parent=1 // pred_region
      %s183 = ssub.s32 256, 256
      %184 = vsyncadd [#allocation4], %s183
      %s185 = sshll.u32 [#allocation7], 4
      %s186 = int_to_ptr.vmem [resolvable:$true] %s185
      %191 = dma.vmem_to_hbm [thread:$0]  %s186, 256, %s4, [#allocation4], 128, 128, 8
    $region29: #{tpu_custom_call.1} parent=1 // pred_fallthru
      _
    // Predicated region
    $region30: #{tpu_custom_call.1} parent=1 // pred_check
      _
    $region31: #{tpu_custom_call.1} parent=1 // pred_check_branch
      %193 = sbr.rel (0) target = $region33
    $region32: #{tpu_custom_call.1} parent=1 // pred_region
      %194 = dma.done [#allocation4], 256
    $region33: #{tpu_custom_call.1} parent=1 // pred_fallthru
      _
    %195 = vsyncpa [#allocation3], 1
    %196 = vsyncpa [#allocation6], 1
    %197 = vsyncpa [#allocation4], 1

</llo_original>
